<compile_context>
chip_gen: v7x
topology: tpu7x:2x2x1
jax: 0.10.0
libtpu: 0.0.40
codegen_flags: <defaults>
</compile_context>

<pallas_src>
import functools

import jax
import jax.numpy as jnp
from jax.experimental import pallas as pl
from jax.experimental.pallas import tpu as pltpu


def _round_up(n, m):
    return ((n + m - 1) // m) * m


def _pack_rows(blocks, width):
    """Stack 2-D blocks into one (rows, width) f32 array; each block starts on an
    8-row (sublane) boundary.  Returns (packed_array, row_offsets)."""
    offs = []
    rows = 0
    for b in blocks:
        offs.append(rows)
        rows += _round_up(b.shape[0], 8)
    packed = jnp.zeros((rows, width), jnp.float32)
    for off, b in zip(offs, blocks):
        packed = packed.at[off:off + b.shape[0], :b.shape[1]].set(b.astype(jnp.float32))
    return packed, tuple(offs)


def _encoder_kernel(x_ref, p_ref, h_out_ref, *, seq_len, batch_pad, batch_out,
                    hidden_dim, emb_pad, activation, offs):
    """Single invocation: hoisted input projection + statically unrolled LSTM."""
    T, Bp, H = seq_len, batch_pad, hidden_dim
    G = 4 * H

    x_all = x_ref[...]                                    # (T*Bp, 2)
    x0 = x_all[:, 0:1]                                    # (T*Bp, 1)
    x1 = x_all[:, 1:2]

    if activation:
        o_we, o_be, o_wi, o_bc, o_wh = offs
        we0 = p_ref[o_we + 0:o_we + 1, 0:emb_pad]         # (1, Ep)
        we1 = p_ref[o_we + 1:o_we + 2, 0:emb_pad]
        be = p_ref[o_be:o_be + 1, 0:emb_pad]
        w_ih = p_ref[o_wi:o_wi + emb_pad, 0:G]            # (Ep, G)
        b_c = p_ref[o_bc:o_bc + 1, 0:G]
        w_hh = p_ref[o_wh:o_wh + H, 0:G]                  # (H, G)

        # Embedding: K=2 contraction stays on the VPU (two broadcast FMAs).
        emb = x0 * we0 + x1 * we1 + be                    # (T*Bp, Ep), lane-dense
        emb = jnp.maximum(emb, 0.0)                       # ReLU
        # Lane-dense (T*Bp, Ep) @ (Ep, G) on the MXU; bias folded in once.
        x_proj = jnp.dot(emb, w_ih, preferred_element_type=jnp.float32) + b_c
    else:
        o_wc, o_bc, o_wh = offs
        wc0 = p_ref[o_wc + 0:o_wc + 1, 0:G]               # (1, G)
        wc1 = p_ref[o_wc + 1:o_wc + 2, 0:G]
        b_c = p_ref[o_bc:o_bc + 1, 0:G]
        w_hh = p_ref[o_wh:o_wh + H, 0:G]
        # Embedding folded into the LSTM input projection; K=2 -> VPU FMAs.
        x_proj = x0 * wc0 + x1 * wc1 + b_c                # (T*Bp, G)

    # ---- serial recurrence; h/c live in vregs; T is small and static ----
    h = jnp.zeros((Bp, H), jnp.float32)
    c = jnp.zeros((Bp, H), jnp.float32)
    for t in range(T):                                    # fully unrolled
        gates = x_proj[t * Bp:(t + 1) * Bp, :] + jnp.dot(
            h, w_hh, preferred_element_type=jnp.float32)  # (Bp, 4H)
        # g-gate columns were pre-scaled by 2 in the wrapper, so a SINGLE sigmoid
        # over the full (Bp, 4H) block suffices: tanh(g) == 2*sigmoid(2g) - 1.
        s = jax.nn.sigmoid(gates)
        i_g = s[:, 0 * H:1 * H]
        f_g = s[:, 1 * H:2 * H]
        g_g = 2.0 * s[:, 2 * H:3 * H] - 1.0               # VPU fix-up, EUP-free
        o_g = s[:, 3 * H:4 * H]
        c = f_g * c + i_g * g_g
        h = o_g * jnp.tanh(c)

    # Final-shape store: (1, B, H) -> no post-kernel slice/reshape needed.
    h_out_ref[0, :, :] = h[:batch_out, :]


def encoder_forward(x, params, *, activation=False):
    """x: (T, B, 2) f32 -> h_T: (1, B, hidden_dim) f32 (== PyTorch state[0])."""
    T, B, _ = x.shape
    w_emb, b_emb, w_ih, w_hh, b_ih, b_hh = params
    E = w_emb.shape[1]
    H = w_hh.shape[0]
    G = 4 * H

    # pad batch to a sublane multiple (8); padded rows never leave the kernel.
    Bp = _round_up(max(B, 1), 8)
    if Bp != B:
        x = jnp.pad(x, ((0, 0), (0, Bp - B), (0, 0)))
    x_flat = x.reshape(T * Bp, 2)

    # Pre-scale the g-gate (tanh) columns by 2 so the kernel needs only one
    # sigmoid per step (tanh(x) == 2*sigmoid(2x) - 1).
    def scale_g(m):
        return m.at[..., 2 * H:3 * H].multiply(2.0)

    b_lstm = (b_ih + b_hh).reshape(1, G)                  # fold the two LSTM biases
    w_hh_s = scale_g(w_hh)

    if activation:
        Ep = _round_up(E, 128)                            # lane-dense intermediate
        w_emb_p = jnp.zeros((2, Ep), jnp.float32).at[:, :E].set(w_emb)
        b_emb_p = jnp.zeros((1, Ep), jnp.float32).at[:, :E].set(b_emb.reshape(1, E))
        w_ih_p = jnp.zeros((Ep, G), jnp.float32).at[:E, :].set(scale_g(w_ih))
        width = max(Ep, G)
        packed, offs = _pack_rows(
            [w_emb_p, b_emb_p, w_ih_p, scale_g(b_lstm), w_hh_s], width)
    else:
        Ep = 0
        # fold the embedding Linear into the LSTM input projection (exact, no ReLU)
        w_comb = scale_g(w_emb @ w_ih)                                   # (2, 4H)
        b_comb = scale_g(b_emb.reshape(1, E) @ w_ih + b_lstm)            # (1, 4H)
        packed, offs = _pack_rows([w_comb, b_comb, w_hh_s], G)

    kernel = functools.partial(
        _encoder_kernel, seq_len=T, batch_pad=Bp, batch_out=B, hidden_dim=H,
        emb_pad=Ep, activation=activation, offs=offs)

    vmem = pl.BlockSpec(memory_space=pltpu.MemorySpace.VMEM)
    return pl.pallas_call(
        kernel,
        out_shape=jax.ShapeDtypeStruct((1, B, H), jnp.float32),
        in_specs=[vmem, vmem],                            # 2 input DMAs total
        out_specs=vmem,
    )(x_flat, packed)


def init_params(key, embedding_dim, hidden_dim):
    """Deterministic synthetic parameters (PyTorch shapes, stored transposed for dot)."""
    ks = jax.random.split(key, 6)
    E, H = embedding_dim, hidden_dim
    w_emb = jax.random.normal(ks[0], (2, E), jnp.float32) * 0.2       # Linear weight^T
    b_emb = jax.random.normal(ks[1], (1, E), jnp.float32) * 0.1
    w_ih = jax.random.normal(ks[2], (E, 4 * H), jnp.float32) * 0.2    # LSTM W_ih^T
    w_hh = jax.random.normal(ks[3], (H, 4 * H), jnp.float32) * 0.2    # LSTM W_hh^T
    b_ih = jax.random.normal(ks[4], (1, 4 * H), jnp.float32) * 0.1
    b_hh = jax.random.normal(ks[5], (1, 4 * H), jnp.float32) * 0.1
    return (w_emb, b_emb, w_ih, w_hh, b_ih, b_hh)


def encoder_reference(x, params, *, activation=False):
    """Pure-JAX reference (mirrors the PyTorch module)."""
    w_emb, b_emb, w_ih, w_hh, b_ih, b_hh = params
    H = w_hh.shape[0]
    T, B, _ = x.shape
    emb = x.reshape(-1, 2) @ w_emb + b_emb
    if activation:
        emb = jnp.maximum(emb, 0.0)
    emb = emb.reshape(T, B, -1)

    def step(carry, x_t):
        h, c = carry
        gates = x_t @ w_ih + b_ih + h @ w_hh + b_hh
        i = jax.nn.sigmoid(gates[:, 0 * H:1 * H])
        f = jax.nn.sigmoid(gates[:, 1 * H:2 * H])
        g = jnp.tanh(gates[:, 2 * H:3 * H])
        o = jax.nn.sigmoid(gates[:, 3 * H:4 * H])
        c_new = f * c + i * g
        h_new = o * jnp.tanh(c_new)
        return (h_new, c_new), None

    h0 = jnp.zeros((B, H), jnp.float32)
    c0 = jnp.zeros((B, H), jnp.float32)
    (h_T, _), _ = jax.lax.scan(step, (h0, c0), emb)
    return h_T[None]  # (1, B, H)


if __name__ == "__main__":
    # Small shapes consistent with the module: traj length T=8, batch (pedestrians)=4,
    # embedding_dim=16, hidden_dim=32, num_layers=1.
    T, B, E, H = 8, 4, 16, 32

    key = jax.random.PRNGKey(0)
    k_x, k_p = jax.random.split(key)
    x = jax.random.normal(k_x, (T, B, 2), jnp.float32)
    params = init_params(k_p, E, H)

    for activation in (False, True):
        h_kernel = encoder_forward(x, params, activation=activation)
        jax.block_until_ready(h_kernel)
        h_ref = encoder_reference(x, params, activation=activation)
        assert h_kernel.shape == (1, B, H)
        assert jnp.allclose(h_kernel, h_ref, atol=1e-5, rtol=1e-5), \
            f"mismatch vs reference (activation={activation})"

    # TODO(synk): only num_layers=1 (the module default) is implemented in-kernel.
    # TODO(synk): for large pedestrian counts, tile batch via a parallel grid axis
    #             (v7x megacore) and move batch to the lane axis; unnecessary at B=4.
    print("KERNEL_OK")
</pallas_src>

<mosaic_0001>
module attributes {stable_mosaic.version = 11 : i64} {
  func.func @_encoder_kernel(%arg0: memref<64x2xf32, #tpu.memory_space<vmem>>, %arg1: memref<48x128xf32, #tpu.memory_space<vmem>>, %arg2: memref<1x4x32xf32, #tpu.memory_space<vmem>>) attributes {dimension_semantics = [], scalar_prefetch = 0 : i64, scratch_operands = 0 : i64, tpu.core_type = #tpu.core_type<tc>} {
    %c0 = arith.constant 0 : index
    %c0_0 = arith.constant 0 : index
    %0 = vector.load %arg0[%c0, %c0_0] : memref<64x2xf32, #tpu.memory_space<vmem>>, vector<64x2xf32>
    %1 = vector.extract_strided_slice %0 {offsets = [0, 0], sizes = [64, 1], strides = [1, 1]} : vector<64x2xf32> to vector<64x1xf32>
    %2 = vector.extract_strided_slice %0 {offsets = [0, 1], sizes = [64, 1], strides = [1, 1]} : vector<64x2xf32> to vector<64x1xf32>
    %c0_1 = arith.constant 0 : index
    %c0_2 = arith.constant 0 : index
    %3 = vector.load %arg1[%c0_1, %c0_2] : memref<48x128xf32, #tpu.memory_space<vmem>>, vector<1x128xf32>
    %c1 = arith.constant 1 : index
    %c0_3 = arith.constant 0 : index
    %4 = vector.load %arg1[%c1, %c0_3] : memref<48x128xf32, #tpu.memory_space<vmem>>, vector<1x128xf32>
    %c8 = arith.constant 8 : index
    %c0_4 = arith.constant 0 : index
    %5 = vector.load %arg1[%c8, %c0_4] : memref<48x128xf32, #tpu.memory_space<vmem>>, vector<1x128xf32>
    %c16 = arith.constant 16 : index
    %c0_5 = arith.constant 0 : index
    %6 = vector.load %arg1[%c16, %c0_5] : memref<48x128xf32, #tpu.memory_space<vmem>>, vector<32x128xf32>
    %7 = vector.broadcast %1 : vector<64x1xf32> to vector<64x128xf32>
    %8 = vector.broadcast %3 : vector<1x128xf32> to vector<64x128xf32>
    %9 = arith.mulf %7, %8 : vector<64x128xf32>
    %10 = vector.broadcast %2 : vector<64x1xf32> to vector<64x128xf32>
    %11 = vector.broadcast %4 : vector<1x128xf32> to vector<64x128xf32>
    %12 = arith.mulf %10, %11 : vector<64x128xf32>
    %13 = arith.addf %9, %12 : vector<64x128xf32>
    %14 = vector.broadcast %5 : vector<1x128xf32> to vector<64x128xf32>
    %15 = arith.addf %13, %14 : vector<64x128xf32>
    %cst = arith.constant 0.000000e+00 : f32
    %16 = vector.broadcast %cst : f32 to vector<8x32xf32>
    %cst_6 = arith.constant 0.000000e+00 : f32
    %17 = vector.broadcast %cst_6 : f32 to vector<8x32xf32>
    %18 = vector.extract_strided_slice %15 {offsets = [0, 0], sizes = [8, 128], strides = [1, 1]} : vector<64x128xf32> to vector<8x128xf32>
    %cst_7 = arith.constant dense<0.000000e+00> : vector<8x128xf32>
    %19 = tpu.matmul %16, %6, %cst_7 {dimension_numbers = #tpu.dot_dimension_numbers<[1], [0], [0], [1], [0, 0, 1, 1], [], []>} : vector<8x32xf32>, vector<32x128xf32>, vector<8x128xf32> -> vector<8x128xf32>
    %20 = arith.addf %18, %19 : vector<8x128xf32>
    %21 = arith.negf %20 : vector<8x128xf32>
    %22 = math.exp %21 : vector<8x128xf32>
    %cst_8 = arith.constant 1.000000e+00 : f32
    %23 = vector.broadcast %cst_8 : f32 to vector<8x128xf32>
    %24 = arith.addf %23, %22 : vector<8x128xf32>
    %25 = arith.divf %23, %24 : vector<8x128xf32>
    %26 = vector.extract_strided_slice %25 {offsets = [0, 0], sizes = [8, 32], strides = [1, 1]} : vector<8x128xf32> to vector<8x32xf32>
    %27 = vector.extract_strided_slice %25 {offsets = [0, 32], sizes = [8, 32], strides = [1, 1]} : vector<8x128xf32> to vector<8x32xf32>
    %28 = vector.extract_strided_slice %25 {offsets = [0, 64], sizes = [8, 32], strides = [1, 1]} : vector<8x128xf32> to vector<8x32xf32>
    %cst_9 = arith.constant 2.000000e+00 : f32
    %29 = vector.broadcast %cst_9 : f32 to vector<8x32xf32>
    %30 = arith.mulf %29, %28 : vector<8x32xf32>
    %cst_10 = arith.constant 1.000000e+00 : f32
    %31 = vector.broadcast %cst_10 : f32 to vector<8x32xf32>
    %32 = arith.subf %30, %31 : vector<8x32xf32>
    %33 = vector.extract_strided_slice %25 {offsets = [0, 96], sizes = [8, 32], strides = [1, 1]} : vector<8x128xf32> to vector<8x32xf32>
    %34 = arith.mulf %27, %17 : vector<8x32xf32>
    %35 = arith.mulf %26, %32 : vector<8x32xf32>
    %36 = arith.addf %34, %35 : vector<8x32xf32>
    %37 = math.tanh %36 : vector<8x32xf32>
    %38 = arith.mulf %33, %37 : vector<8x32xf32>
    %39 = vector.extract_strided_slice %15 {offsets = [8, 0], sizes = [8, 128], strides = [1, 1]} : vector<64x128xf32> to vector<8x128xf32>
    %cst_11 = arith.constant dense<0.000000e+00> : vector<8x128xf32>
    %40 = tpu.matmul %38, %6, %cst_11 {dimension_numbers = #tpu.dot_dimension_numbers<[1], [0], [0], [1], [0, 0, 1, 1], [], []>} : vector<8x32xf32>, vector<32x128xf32>, vector<8x128xf32> -> vector<8x128xf32>
    %41 = arith.addf %39, %40 : vector<8x128xf32>
    %42 = arith.negf %41 : vector<8x128xf32>
    %43 = math.exp %42 : vector<8x128xf32>
    %cst_12 = arith.constant 1.000000e+00 : f32
    %44 = vector.broadcast %cst_12 : f32 to vector<8x128xf32>
    %45 = arith.addf %44, %43 : vector<8x128xf32>
    %46 = arith.divf %44, %45 : vector<8x128xf32>
    %47 = vector.extract_strided_slice %46 {offsets = [0, 0], sizes = [8, 32], strides = [1, 1]} : vector<8x128xf32> to vector<8x32xf32>
    %48 = vector.extract_strided_slice %46 {offsets = [0, 32], sizes = [8, 32], strides = [1, 1]} : vector<8x128xf32> to vector<8x32xf32>
    %49 = vector.extract_strided_slice %46 {offsets = [0, 64], sizes = [8, 32], strides = [1, 1]} : vector<8x128xf32> to vector<8x32xf32>
    %cst_13 = arith.constant 2.000000e+00 : f32
    %50 = vector.broadcast %cst_13 : f32 to vector<8x32xf32>
    %51 = arith.mulf %50, %49 : vector<8x32xf32>
    %cst_14 = arith.constant 1.000000e+00 : f32
    %52 = vector.broadcast %cst_14 : f32 to vector<8x32xf32>
    %53 = arith.subf %51, %52 : vector<8x32xf32>
    %54 = vector.extract_strided_slice %46 {offsets = [0, 96], sizes = [8, 32], strides = [1, 1]} : vector<8x128xf32> to vector<8x32xf32>
    %55 = arith.mulf %48, %36 : vector<8x32xf32>
    %56 = arith.mulf %47, %53 : vector<8x32xf32>
    %57 = arith.addf %55, %56 : vector<8x32xf32>
    %58 = math.tanh %57 : vector<8x32xf32>
    %59 = arith.mulf %54, %58 : vector<8x32xf32>
    %60 = vector.extract_strided_slice %15 {offsets = [16, 0], sizes = [8, 128], strides = [1, 1]} : vector<64x128xf32> to vector<8x128xf32>
    %cst_15 = arith.constant dense<0.000000e+00> : vector<8x128xf32>
    %61 = tpu.matmul %59, %6, %cst_15 {dimension_numbers = #tpu.dot_dimension_numbers<[1], [0], [0], [1], [0, 0, 1, 1], [], []>} : vector<8x32xf32>, vector<32x128xf32>, vector<8x128xf32> -> vector<8x128xf32>
    %62 = arith.addf %60, %61 : vector<8x128xf32>
    %63 = arith.negf %62 : vector<8x128xf32>
    %64 = math.exp %63 : vector<8x128xf32>
    %cst_16 = arith.constant 1.000000e+00 : f32
    %65 = vector.broadcast %cst_16 : f32 to vector<8x128xf32>
    %66 = arith.addf %65, %64 : vector<8x128xf32>
    %67 = arith.divf %65, %66 : vector<8x128xf32>
    %68 = vector.extract_strided_slice %67 {offsets = [0, 0], sizes = [8, 32], strides = [1, 1]} : vector<8x128xf32> to vector<8x32xf32>
    %69 = vector.extract_strided_slice %67 {offsets = [0, 32], sizes = [8, 32], strides = [1, 1]} : vector<8x128xf32> to vector<8x32xf32>
    %70 = vector.extract_strided_slice %67 {offsets = [0, 64], sizes = [8, 32], strides = [1, 1]} : vector<8x128xf32> to vector<8x32xf32>
    %cst_17 = arith.constant 2.000000e+00 : f32
    %71 = vector.broadcast %cst_17 : f32 to vector<8x32xf32>
    %72 = arith.mulf %71, %70 : vector<8x32xf32>
    %cst_18 = arith.constant 1.000000e+00 : f32
    %73 = vector.broadcast %cst_18 : f32 to vector<8x32xf32>
    %74 = arith.subf %72, %73 : vector<8x32xf32>
    %75 = vector.extract_strided_slice %67 {offsets = [0, 96], sizes = [8, 32], strides = [1, 1]} : vector<8x128xf32> to vector<8x32xf32>
    %76 = arith.mulf %69, %57 : vector<8x32xf32>
    %77 = arith.mulf %68, %74 : vector<8x32xf32>
    %78 = arith.addf %76, %77 : vector<8x32xf32>
    %79 = math.tanh %78 : vector<8x32xf32>
    %80 = arith.mulf %75, %79 : vector<8x32xf32>
    %81 = vector.extract_strided_slice %15 {offsets = [24, 0], sizes = [8, 128], strides = [1, 1]} : vector<64x128xf32> to vector<8x128xf32>
    %cst_19 = arith.constant dense<0.000000e+00> : vector<8x128xf32>
    %82 = tpu.matmul %80, %6, %cst_19 {dimension_numbers = #tpu.dot_dimension_numbers<[1], [0], [0], [1], [0, 0, 1, 1], [], []>} : vector<8x32xf32>, vector<32x128xf32>, vector<8x128xf32> -> vector<8x128xf32>
    %83 = arith.addf %81, %82 : vector<8x128xf32>
    %84 = arith.negf %83 : vector<8x128xf32>
    %85 = math.exp %84 : vector<8x128xf32>
    %cst_20 = arith.constant 1.000000e+00 : f32
    %86 = vector.broadcast %cst_20 : f32 to vector<8x128xf32>
    %87 = arith.addf %86, %85 : vector<8x128xf32>
    %88 = arith.divf %86, %87 : vector<8x128xf32>
    %89 = vector.extract_strided_slice %88 {offsets = [0, 0], sizes = [8, 32], strides = [1, 1]} : vector<8x128xf32> to vector<8x32xf32>
    %90 = vector.extract_strided_slice %88 {offsets = [0, 32], sizes = [8, 32], strides = [1, 1]} : vector<8x128xf32> to vector<8x32xf32>
    %91 = vector.extract_strided_slice %88 {offsets = [0, 64], sizes = [8, 32], strides = [1, 1]} : vector<8x128xf32> to vector<8x32xf32>
    %cst_21 = arith.constant 2.000000e+00 : f32
    %92 = vector.broadcast %cst_21 : f32 to vector<8x32xf32>
    %93 = arith.mulf %92, %91 : vector<8x32xf32>
    %cst_22 = arith.constant 1.000000e+00 : f32
    %94 = vector.broadcast %cst_22 : f32 to vector<8x32xf32>
    %95 = arith.subf %93, %94 : vector<8x32xf32>
    %96 = vector.extract_strided_slice %88 {offsets = [0, 96], sizes = [8, 32], strides = [1, 1]} : vector<8x128xf32> to vector<8x32xf32>
    %97 = arith.mulf %90, %78 : vector<8x32xf32>
    %98 = arith.mulf %89, %95 : vector<8x32xf32>
    %99 = arith.addf %97, %98 : vector<8x32xf32>
    %100 = math.tanh %99 : vector<8x32xf32>
    %101 = arith.mulf %96, %100 : vector<8x32xf32>
    %102 = vector.extract_strided_slice %15 {offsets = [32, 0], sizes = [8, 128], strides = [1, 1]} : vector<64x128xf32> to vector<8x128xf32>
    %cst_23 = arith.constant dense<0.000000e+00> : vector<8x128xf32>
    %103 = tpu.matmul %101, %6, %cst_23 {dimension_numbers = #tpu.dot_dimension_numbers<[1], [0], [0], [1], [0, 0, 1, 1], [], []>} : vector<8x32xf32>, vector<32x128xf32>, vector<8x128xf32> -> vector<8x128xf32>
    %104 = arith.addf %102, %103 : vector<8x128xf32>
    %105 = arith.negf %104 : vector<8x128xf32>
    %106 = math.exp %105 : vector<8x128xf32>
    %cst_24 = arith.constant 1.000000e+00 : f32
    %107 = vector.broadcast %cst_24 : f32 to vector<8x128xf32>
    %108 = arith.addf %107, %106 : vector<8x128xf32>
    %109 = arith.divf %107, %108 : vector<8x128xf32>
    %110 = vector.extract_strided_slice %109 {offsets = [0, 0], sizes = [8, 32], strides = [1, 1]} : vector<8x128xf32> to vector<8x32xf32>
    %111 = vector.extract_strided_slice %109 {offsets = [0, 32], sizes = [8, 32], strides = [1, 1]} : vector<8x128xf32> to vector<8x32xf32>
    %112 = vector.extract_strided_slice %109 {offsets = [0, 64], sizes = [8, 32], strides = [1, 1]} : vector<8x128xf32> to vector<8x32xf32>
    %cst_25 = arith.constant 2.000000e+00 : f32
    %113 = vector.broadcast %cst_25 : f32 to vector<8x32xf32>
    %114 = arith.mulf %113, %112 : vector<8x32xf32>
    %cst_26 = arith.constant 1.000000e+00 : f32
    %115 = vector.broadcast %cst_26 : f32 to vector<8x32xf32>
    %116 = arith.subf %114, %115 : vector<8x32xf32>
    %117 = vector.extract_strided_slice %109 {offsets = [0, 96], sizes = [8, 32], strides = [1, 1]} : vector<8x128xf32> to vector<8x32xf32>
    %118 = arith.mulf %111, %99 : vector<8x32xf32>
    %119 = arith.mulf %110, %116 : vector<8x32xf32>
    %120 = arith.addf %118, %119 : vector<8x32xf32>
    %121 = math.tanh %120 : vector<8x32xf32>
    %122 = arith.mulf %117, %121 : vector<8x32xf32>
    %123 = vector.extract_strided_slice %15 {offsets = [40, 0], sizes = [8, 128], strides = [1, 1]} : vector<64x128xf32> to vector<8x128xf32>
    %cst_27 = arith.constant dense<0.000000e+00> : vector<8x128xf32>
    %124 = tpu.matmul %122, %6, %cst_27 {dimension_numbers = #tpu.dot_dimension_numbers<[1], [0], [0], [1], [0, 0, 1, 1], [], []>} : vector<8x32xf32>, vector<32x128xf32>, vector<8x128xf32> -> vector<8x128xf32>
    %125 = arith.addf %123, %124 : vector<8x128xf32>
    %126 = arith.negf %125 : vector<8x128xf32>
    %127 = math.exp %126 : vector<8x128xf32>
    %cst_28 = arith.constant 1.000000e+00 : f32
    %128 = vector.broadcast %cst_28 : f32 to vector<8x128xf32>
    %129 = arith.addf %128, %127 : vector<8x128xf32>
    %130 = arith.divf %128, %129 : vector<8x128xf32>
    %131 = vector.extract_strided_slice %130 {offsets = [0, 0], sizes = [8, 32], strides = [1, 1]} : vector<8x128xf32> to vector<8x32xf32>
    %132 = vector.extract_strided_slice %130 {offsets = [0, 32], sizes = [8, 32], strides = [1, 1]} : vector<8x128xf32> to vector<8x32xf32>
    %133 = vector.extract_strided_slice %130 {offsets = [0, 64], sizes = [8, 32], strides = [1, 1]} : vector<8x128xf32> to vector<8x32xf32>
    %cst_29 = arith.constant 2.000000e+00 : f32
    %134 = vector.broadcast %cst_29 : f32 to vector<8x32xf32>
    %135 = arith.mulf %134, %133 : vector<8x32xf32>
    %cst_30 = arith.constant 1.000000e+00 : f32
    %136 = vector.broadcast %cst_30 : f32 to vector<8x32xf32>
    %137 = arith.subf %135, %136 : vector<8x32xf32>
    %138 = vector.extract_strided_slice %130 {offsets = [0, 96], sizes = [8, 32], strides = [1, 1]} : vector<8x128xf32> to vector<8x32xf32>
    %139 = arith.mulf %132, %120 : vector<8x32xf32>
    %140 = arith.mulf %131, %137 : vector<8x32xf32>
    %141 = arith.addf %139, %140 : vector<8x32xf32>
    %142 = math.tanh %141 : vector<8x32xf32>
    %143 = arith.mulf %138, %142 : vector<8x32xf32>
    %144 = vector.extract_strided_slice %15 {offsets = [48, 0], sizes = [8, 128], strides = [1, 1]} : vector<64x128xf32> to vector<8x128xf32>
    %cst_31 = arith.constant dense<0.000000e+00> : vector<8x128xf32>
    %145 = tpu.matmul %143, %6, %cst_31 {dimension_numbers = #tpu.dot_dimension_numbers<[1], [0], [0], [1], [0, 0, 1, 1], [], []>} : vector<8x32xf32>, vector<32x128xf32>, vector<8x128xf32> -> vector<8x128xf32>
    %146 = arith.addf %144, %145 : vector<8x128xf32>
    %147 = arith.negf %146 : vector<8x128xf32>
    %148 = math.exp %147 : vector<8x128xf32>
    %cst_32 = arith.constant 1.000000e+00 : f32
    %149 = vector.broadcast %cst_32 : f32 to vector<8x128xf32>
    %150 = arith.addf %149, %148 : vector<8x128xf32>
    %151 = arith.divf %149, %150 : vector<8x128xf32>
    %152 = vector.extract_strided_slice %151 {offsets = [0, 0], sizes = [8, 32], strides = [1, 1]} : vector<8x128xf32> to vector<8x32xf32>
    %153 = vector.extract_strided_slice %151 {offsets = [0, 32], sizes = [8, 32], strides = [1, 1]} : vector<8x128xf32> to vector<8x32xf32>
    %154 = vector.extract_strided_slice %151 {offsets = [0, 64], sizes = [8, 32], strides = [1, 1]} : vector<8x128xf32> to vector<8x32xf32>
    %cst_33 = arith.constant 2.000000e+00 : f32
    %155 = vector.broadcast %cst_33 : f32 to vector<8x32xf32>
    %156 = arith.mulf %155, %154 : vector<8x32xf32>
    %cst_34 = arith.constant 1.000000e+00 : f32
    %157 = vector.broadcast %cst_34 : f32 to vector<8x32xf32>
    %158 = arith.subf %156, %157 : vector<8x32xf32>
    %159 = vector.extract_strided_slice %151 {offsets = [0, 96], sizes = [8, 32], strides = [1, 1]} : vector<8x128xf32> to vector<8x32xf32>
    %160 = arith.mulf %153, %141 : vector<8x32xf32>
    %161 = arith.mulf %152, %158 : vector<8x32xf32>
    %162 = arith.addf %160, %161 : vector<8x32xf32>
    %163 = math.tanh %162 : vector<8x32xf32>
    %164 = arith.mulf %159, %163 : vector<8x32xf32>
    %165 = vector.extract_strided_slice %15 {offsets = [56, 0], sizes = [8, 128], strides = [1, 1]} : vector<64x128xf32> to vector<8x128xf32>
    %cst_35 = arith.constant dense<0.000000e+00> : vector<8x128xf32>
    %166 = tpu.matmul %164, %6, %cst_35 {dimension_numbers = #tpu.dot_dimension_numbers<[1], [0], [0], [1], [0, 0, 1, 1], [], []>} : vector<8x32xf32>, vector<32x128xf32>, vector<8x128xf32> -> vector<8x128xf32>
    %167 = arith.addf %165, %166 : vector<8x128xf32>
    %168 = arith.negf %167 : vector<8x128xf32>
    %169 = math.exp %168 : vector<8x128xf32>
    %cst_36 = arith.constant 1.000000e+00 : f32
    %170 = vector.broadcast %cst_36 : f32 to vector<8x128xf32>
    %171 = arith.addf %170, %169 : vector<8x128xf32>
    %172 = arith.divf %170, %171 : vector<8x128xf32>
    %173 = vector.extract_strided_slice %172 {offsets = [0, 0], sizes = [8, 32], strides = [1, 1]} : vector<8x128xf32> to vector<8x32xf32>
    %174 = vector.extract_strided_slice %172 {offsets = [0, 32], sizes = [8, 32], strides = [1, 1]} : vector<8x128xf32> to vector<8x32xf32>
    %175 = vector.extract_strided_slice %172 {offsets = [0, 64], sizes = [8, 32], strides = [1, 1]} : vector<8x128xf32> to vector<8x32xf32>
    %cst_37 = arith.constant 2.000000e+00 : f32
    %176 = vector.broadcast %cst_37 : f32 to vector<8x32xf32>
    %177 = arith.mulf %176, %175 : vector<8x32xf32>
    %cst_38 = arith.constant 1.000000e+00 : f32
    %178 = vector.broadcast %cst_38 : f32 to vector<8x32xf32>
    %179 = arith.subf %177, %178 : vector<8x32xf32>
    %180 = vector.extract_strided_slice %172 {offsets = [0, 96], sizes = [8, 32], strides = [1, 1]} : vector<8x128xf32> to vector<8x32xf32>
    %181 = arith.mulf %174, %162 : vector<8x32xf32>
    %182 = arith.mulf %173, %179 : vector<8x32xf32>
    %183 = arith.addf %181, %182 : vector<8x32xf32>
    %184 = math.tanh %183 : vector<8x32xf32>
    %185 = arith.mulf %180, %184 : vector<8x32xf32>
    %186 = vector.extract_strided_slice %185 {offsets = [0, 0], sizes = [4, 32], strides = [1, 1]} : vector<8x32xf32> to vector<4x32xf32>
    %c0_39 = arith.constant 0 : index
    %c0_40 = arith.constant 0 : index
    %c0_41 = arith.constant 0 : index
    %187 = vector.load %arg2[%c0_39, %c0_40, %c0_41] : memref<1x4x32xf32, #tpu.memory_space<vmem>>, vector<1x4x32xf32>
    %188 = vector.shape_cast %187 : vector<1x4x32xf32> to vector<4x32xf32>
    %189 = vector.shape_cast %186 : vector<4x32xf32> to vector<1x4x32xf32>
    tpu.vector_store %arg2[%c0_39, %c0_40, %c0_41], %189 {strides = array<i32>} : memref<1x4x32xf32, #tpu.memory_space<vmem>>, vector<1x4x32xf32>,
    return
  }
}

</mosaic_0001>

<llo_original>
// kernel: tpu_custom_call.1
$region0: #{tpu_custom_call.1}
  #allocation0 [shape = 'u32[]', space=smem, size = 0x4, offset = 0x4, fixed_abs, tag = 'smem constant byte address 0x4 - core index']
  #allocation1 [shape = 'u32[144,128]{1,0:T(1,128)}', space=vmem, size = 0x12000, scoped, tag = 'internal scratch']
  %s0 = inlined_call_operand.vmem [shape: f32[64,2], index: 0, kind: input, shape index: {}]
  %s1 = inlined_call_operand.vmem [shape: f32[48,128], index: 1, kind: input, shape index: {}]
  %s2 = inlined_call_operand.hbm [shape: f32[1,4,32], index: 2, kind: output, shape index: {}]
  %s3 = sld [smem:[#allocation0]]
  $region18: #{tpu_custom_call.1} parent=0
    _
  %s5 = ssub.s32 1, %s3
  %s6 = scalar_select 0, %s5, %s3
  $region1: #{tpu_custom_call.1} parent=0
    #allocation2 [shape = 'u8[2048]{0}', space=vmem, size = 0x800, scoped, tag = 'output window, operand 0, single buffered']
    #allocation3 [shape = 's32[1]{0}', space=sflag, size = 0x4, scoped, tag = 'scoped memory for tpu_custom_call.1']
    %7 = vsyncpa [#allocation3], 0
    // Predicated region
    $region2: #{tpu_custom_call.1} parent=1 // pred_check
      _
    $region3: #{tpu_custom_call.1} parent=1 // pred_check_branch
      %9 = sbr.rel (0) target = $region5
    $region4: #{tpu_custom_call.1} parent=1 // pred_region
      _
    $region5: #{tpu_custom_call.1} parent=1 // pred_fallthru
      _
    // Predicated region
    $region6: #{tpu_custom_call.1} parent=1 // pred_check
      _
    $region7: #{tpu_custom_call.1} parent=1 // pred_check_branch
      %11 = sbr.rel (0) target = $region9
    $region8: #{tpu_custom_call.1} parent=1 // pred_region
      _
    $region9: #{tpu_custom_call.1} parent=1 // pred_fallthru
      _
    %v12 = vld [vmem:[%s0] sm:$0xff]
    %v13 = vld [vmem:[%s0 + $0x8] sm:$0xff]
    %v14 = vld [vmem:[%s0 + $0x10] sm:$0xff]
    %v15 = vld [vmem:[%s0 + $0x18] sm:$0xff]
    %v16 = vld [vmem:[%s0 + $0x20] sm:$0xff]
    %v17 = vld [vmem:[%s0 + $0x28] sm:$0xff]
    %v18 = vld [vmem:[%s0 + $0x30] sm:$0xff]
    %v19 = vld [vmem:[%s0 + $0x38] sm:$0xff]
    %v20 = vld [vmem:[%s1] sm:$0x1]
    %v21 = vld [vmem:[%s1 + $0x1] sm:$0x1]
    %v22 = vld [vmem:[%s1 + $0x8] sm:$0x1]
    %v23 = vld [vmem:[%s1 + $0x10] sm:$0xff]
    %v24 = vld [vmem:[%s1 + $0x18] sm:$0xff]
    %v25 = vld [vmem:[%s1 + $0x20] sm:$0xff]
    %v26 = vld [vmem:[%s1 + $0x28] sm:$0xff]
    %28 = vset.pattern.permute.xlu0 0
    %29 = vperm.xlu0 %28, %v12
    %v30 = vpop.permute.xlu0 %29
    %33 = vset.pattern.permute.xlu0 0
    %34 = vperm.xlu0 %33, %v13
    %v35 = vpop.permute.xlu0 %34
    %38 = vset.pattern.permute.xlu0 0
    %39 = vperm.xlu0 %38, %v14
    %v40 = vpop.permute.xlu0 %39
    %43 = vset.pattern.permute.xlu0 0
    %44 = vperm.xlu0 %43, %v15
    %v45 = vpop.permute.xlu0 %44
    %48 = vset.pattern.permute.xlu0 0
    %49 = vperm.xlu0 %48, %v16
    %v50 = vpop.permute.xlu0 %49
    %53 = vset.pattern.permute.xlu0 0
    %54 = vperm.xlu0 %53, %v17
    %v55 = vpop.permute.xlu0 %54
    %58 = vset.pattern.permute.xlu0 0
    %59 = vperm.xlu0 %58, %v18
    %v60 = vpop.permute.xlu0 %59
    %63 = vset.pattern.permute.xlu0 0
    %64 = vperm.xlu0 %63, %v19
    %v65 = vpop.permute.xlu0 %64
    %v67 = vlaneseq
    %v68 = vshrl.u32 %v67, 7
    %v69 = vsub.s32 0, %v68
    %v70 = vrot.slane %v20, %v69
    %v71 = vmul.f32 %v30, %v70
    %v72 = vmul.f32 %v35, %v70
    %v73 = vmul.f32 %v40, %v70
    %v74 = vmul.f32 %v45, %v70
    %v75 = vmul.f32 %v50, %v70
    %v76 = vmul.f32 %v55, %v70
    %v77 = vmul.f32 %v60, %v70
    %v78 = vmul.f32 %v65, %v70
    %79 = vset.pattern.permute.xlu0 1
    %80 = vperm.xlu0 %79, %v12
    %v81 = vpop.permute.xlu0 %80
    %83 = vset.pattern.permute.xlu0 1
    %84 = vperm.xlu0 %83, %v13
    %v85 = vpop.permute.xlu0 %84
    %87 = vset.pattern.permute.xlu0 1
    %88 = vperm.xlu0 %87, %v14
    %v89 = vpop.permute.xlu0 %88
    %91 = vset.pattern.permute.xlu0 1
    %92 = vperm.xlu0 %91, %v15
    %v93 = vpop.permute.xlu0 %92
    %95 = vset.pattern.permute.xlu0 1
    %96 = vperm.xlu0 %95, %v16
    %v97 = vpop.permute.xlu0 %96
    %99 = vset.pattern.permute.xlu0 1
    %100 = vperm.xlu0 %99, %v17
    %v101 = vpop.permute.xlu0 %100
    %103 = vset.pattern.permute.xlu0 1
    %104 = vperm.xlu0 %103, %v18
    %v105 = vpop.permute.xlu0 %104
    %107 = vset.pattern.permute.xlu0 1
    %108 = vperm.xlu0 %107, %v19
    %v109 = vpop.permute.xlu0 %108
    %v111 = vlaneseq
    %v112 = vshrl.u32 %v111, 7
    %v113 = vsub.s32 0, %v112
    %v114 = vrot.slane %v21, %v113
    %v115 = vmul.f32 %v81, %v114
    %v116 = vmul.f32 %v85, %v114
    %v117 = vmul.f32 %v89, %v114
    %v118 = vmul.f32 %v93, %v114
    %v119 = vmul.f32 %v97, %v114
    %v120 = vmul.f32 %v101, %v114
    %v121 = vmul.f32 %v105, %v114
    %v122 = vmul.f32 %v109, %v114
    %v123 = vadd.f32 %v71, %v115
    %v124 = vadd.f32 %v72, %v116
    %v125 = vadd.f32 %v73, %v117
    %v126 = vadd.f32 %v74, %v118
    %v127 = vadd.f32 %v75, %v119
    %v128 = vadd.f32 %v76, %v120
    %v129 = vadd.f32 %v77, %v121
    %v130 = vadd.f32 %v78, %v122
    %v131 = vlaneseq
    %v132 = vshrl.u32 %v131, 7
    %v133 = vsub.s32 0, %v132
    %v134 = vrot.slane %v22, %v133
    %v135 = vadd.f32 %v123, %v134
    %v136 = vadd.f32 %v124, %v134
    %v137 = vadd.f32 %v125, %v134
    %v138 = vadd.f32 %v126, %v134
    %v139 = vadd.f32 %v127, %v134
    %v140 = vadd.f32 %v128, %v134
    %v141 = vadd.f32 %v129, %v134
    %v142 = vadd.f32 %v130, %v134
    %vm143 = vcmask 261120
    %v145 = vsel %vm143, 0.0, 0
    %147 = vmatprep.subr.mxu0 0.0
    %148 = vmatpush1.msra.mxu0 %v23
    %149 = vmatprep.subr.mxu0 0.0
    %150 = vmatpush1.msra.mxu0 %v24
    %151 = vmatprep.subr.mxu0 0.0
    %152 = vmatpush1.msra.mxu0 %v25
    %153 = vmatprep.subr.mxu0 0.0
    %154 = vmatpush1.msra.mxu0 %v26
    %155 = vmatprep.subr.mxu0 0.0
    %156 = vmatpush1.msra.mxu0 0.0
    %157 = vmatprep.subr.mxu0 0.0
    %158 = vmatpush1.msra.mxu0 0.0
    %159 = vmatprep.subr.mxu0 0.0
    %160 = vmatpush1.msra.mxu0 0.0
    %161 = vmatprep.subr.mxu0 0.0
    %162 = vmatpush1.msra.mxu0 0.0
    %163 = vmatprep.subr.mxu0 0.0
    %164 = vmatpush1.msra.mxu0 0.0
    %165 = vmatprep.subr.mxu0 0.0
    %166 = vmatpush1.msra.mxu0 0.0
    %167 = vmatprep.subr.mxu0 0.0
    %168 = vmatpush1.msra.mxu0 0.0
    %169 = vmatprep.subr.mxu0 0.0
    %170 = vmatpush1.msra.mxu0 0.0
    %171 = vmatprep.subr.mxu0 0.0
    %172 = vmatpush1.msra.mxu0 0.0
    %173 = vmatprep.subr.mxu0 0.0
    %174 = vmatpush1.msra.mxu0 0.0
    %175 = vmatprep.subr.mxu0 0.0
    %176 = vmatpush1.msra.mxu0 0.0
    %177 = vmatprep.subr.mxu0 0.0
    %178 = vmatpush1.msra.mxu0 0.0
    %179 = vmatprep.subr.mxu0 0.0
    %180 = vmatpush1.msra.mxu0 0.0
    %181 = vmatprep.subr.mxu0 0.0
    %182 = vmatpush1.msra.mxu0 0.0
    %183 = vmatprep.subr.mxu0 0.0
    %184 = vmatpush1.msra.mxu0 0.0
    %185 = vmatprep.subr.mxu0 0.0
    %186 = vmatpush1.msra.mxu0 0.0
    %187 = vmatprep.subr.mxu0 0.0
    %188 = vmatpush1.msra.mxu0 0.0
    %189 = vmatprep.subr.mxu0 0.0
    %190 = vmatpush1.msra.mxu0 0.0
    %191 = vmatprep.subr.mxu0 0.0
    %192 = vmatpush1.msra.mxu0 0.0
    %193 = vmatprep.subr.mxu0 0.0
    %194 = vmatpush1.msra.mxu0 0.0
    %195 = vmatprep.subr.mxu0 0.0
    %196 = vmatpush1.msra.mxu0 0.0
    %197 = vmatprep.subr.mxu0 0.0
    %198 = vmatpush1.msra.mxu0 0.0
    %199 = vmatprep.subr.mxu0 0.0
    %200 = vmatpush1.msra.mxu0 0.0
    %201 = vmatprep.subr.mxu0 0.0
    %202 = vmatpush1.msra.mxu0 0.0
    %203 = vmatprep.subr.mxu0 0.0
    %204 = vmatpush1.msra.mxu0 0.0
    %205 = vmatprep.subr.mxu0 0.0
    %206 = vmatpush1.msra.mxu0 0.0
    %207 = vmatprep.subr.mxu0 0.0
    %208 = vmatpush1.msra.mxu0 0.0
    %209 = vmatprep.subr.mxu0 0.0
    %210 = vmatpush1.msra.mxu0 0.0
    %211 = vmatprep.mubr.f32.mxu0 0.0
    %212 = vmatmul.mubr.f32.gmra.mrb[0].mxu0 %v145
    %v213 = vpop.f32.mrb[0].mxu0
    %v214 = vadd.f32 0.0, %v213
    %v215 = vpop.f32.mrb[0].mxu0
    %216 = vdwg.mxu0
    %v217 = vadd.f32 %v135, %v214
    %v218 = vxor.u32 %v217, 2147483648
    %v219 = vmul.f32 %v218, 1.442695
    %v220 = vpow.pop %v219
    %v221 = vadd.f32 %v220, 1.0
    %v222 = vrcp.pop %v221
    %v223 = vmul.f32 1.0, %v222
    %v224 = vmul.f32 %v223, 2.0
    %v225 = vsub.f32 %v224, 1.0
    %v226 = vmul.f32 %v223, 0.0
    %228 = vrot.lane.b32.xlu0 %v225, 64
    %v229 = vpop.permute.xlu0 %228
    %v231 = vmul.f32 %v223, %v229
    %233 = vrot.lane.b32.xlu0 %v231, 32
    %v234 = vpop.permute.xlu0 %233
    %v236 = vadd.f32 %v226, %v234
    %v237 = vtanh.pop %v236
    %239 = vrot.lane.b32.xlu0 %v237, 64
    %v240 = vpop.permute.xlu0 %239
    %v242 = vmul.f32 %v223, %v240
    %244 = vrot.lane.b32.xlu0 %v242, 32
    %v245 = vpop.permute.xlu0 %244
    %v246 = vsel %vm143, %v245, 0
    %248 = vmatprep.subr.mxu0 0.0
    %249 = vmatpush1.msra.mxu0 %v23
    %250 = vmatprep.subr.mxu0 0.0
    %251 = vmatpush1.msra.mxu0 %v24
    %252 = vmatprep.subr.mxu0 0.0
    %253 = vmatpush1.msra.mxu0 %v25
    %254 = vmatprep.subr.mxu0 0.0
    %255 = vmatpush1.msra.mxu0 %v26
    %256 = vmatprep.subr.mxu0 0.0
    %257 = vmatpush1.msra.mxu0 0.0
    %258 = vmatprep.subr.mxu0 0.0
    %259 = vmatpush1.msra.mxu0 0.0
    %260 = vmatprep.subr.mxu0 0.0
    %261 = vmatpush1.msra.mxu0 0.0
    %262 = vmatprep.subr.mxu0 0.0
    %263 = vmatpush1.msra.mxu0 0.0
    %264 = vmatprep.subr.mxu0 0.0
    %265 = vmatpush1.msra.mxu0 0.0
    %266 = vmatprep.subr.mxu0 0.0
    %267 = vmatpush1.msra.mxu0 0.0
    %268 = vmatprep.subr.mxu0 0.0
    %269 = vmatpush1.msra.mxu0 0.0
    %270 = vmatprep.subr.mxu0 0.0
    %271 = vmatpush1.msra.mxu0 0.0
    %272 = vmatprep.subr.mxu0 0.0
    %273 = vmatpush1.msra.mxu0 0.0
    %274 = vmatprep.subr.mxu0 0.0
    %275 = vmatpush1.msra.mxu0 0.0
    %276 = vmatprep.subr.mxu0 0.0
    %277 = vmatpush1.msra.mxu0 0.0
    %278 = vmatprep.subr.mxu0 0.0
    %279 = vmatpush1.msra.mxu0 0.0
    %280 = vmatprep.subr.mxu0 0.0
    %281 = vmatpush1.msra.mxu0 0.0
    %282 = vmatprep.subr.mxu0 0.0
    %283 = vmatpush1.msra.mxu0 0.0
    %284 = vmatprep.subr.mxu0 0.0
    %285 = vmatpush1.msra.mxu0 0.0
    %286 = vmatprep.subr.mxu0 0.0
    %287 = vmatpush1.msra.mxu0 0.0
    %288 = vmatprep.subr.mxu0 0.0
    %289 = vmatpush1.msra.mxu0 0.0
    %290 = vmatprep.subr.mxu0 0.0
    %291 = vmatpush1.msra.mxu0 0.0
    %292 = vmatprep.subr.mxu0 0.0
    %293 = vmatpush1.msra.mxu0 0.0
    %294 = vmatprep.subr.mxu0 0.0
    %295 = vmatpush1.msra.mxu0 0.0
    %296 = vmatprep.subr.mxu0 0.0
    %297 = vmatpush1.msra.mxu0 0.0
    %298 = vmatprep.subr.mxu0 0.0
    %299 = vmatpush1.msra.mxu0 0.0
    %300 = vmatprep.subr.mxu0 0.0
    %301 = vmatpush1.msra.mxu0 0.0
    %302 = vmatprep.subr.mxu0 0.0
    %303 = vmatpush1.msra.mxu0 0.0
    %304 = vmatprep.subr.mxu0 0.0
    %305 = vmatpush1.msra.mxu0 0.0
    %306 = vmatprep.subr.mxu0 0.0
    %307 = vmatpush1.msra.mxu0 0.0
    %308 = vmatprep.subr.mxu0 0.0
    %309 = vmatpush1.msra.mxu0 0.0
    %310 = vmatprep.subr.mxu0 0.0
    %311 = vmatpush1.msra.mxu0 0.0
    %312 = vmatprep.mubr.f32.mxu0 0.0
    %313 = vmatmul.mubr.f32.gmra.mrb[0].mxu0 %v246
    %v314 = vpop.f32.mrb[0].mxu0
    %v315 = vadd.f32 0.0, %v314
    %v316 = vpop.f32.mrb[0].mxu0
    %317 = vdwg.mxu0
    %v318 = vadd.f32 %v136, %v315
    %v319 = vxor.u32 %v318, 2147483648
    %v320 = vmul.f32 %v319, 1.442695
    %v321 = vpow.pop %v320
    %v322 = vadd.f32 %v321, 1.0
    %v323 = vrcp.pop %v322
    %v324 = vmul.f32 1.0, %v323
    %v325 = vmul.f32 %v324, 2.0
    %v326 = vsub.f32 %v325, 1.0
    %v327 = vmul.f32 %v324, %v236
    %329 = vrot.lane.b32.xlu0 %v326, 64
    %v330 = vpop.permute.xlu0 %329
    %v332 = vmul.f32 %v324, %v330
    %334 = vrot.lane.b32.xlu0 %v332, 32
    %v335 = vpop.permute.xlu0 %334
    %v337 = vadd.f32 %v327, %v335
    %v338 = vtanh.pop %v337
    %340 = vrot.lane.b32.xlu0 %v338, 64
    %v341 = vpop.permute.xlu0 %340
    %v343 = vmul.f32 %v324, %v341
    %345 = vrot.lane.b32.xlu0 %v343, 32
    %v346 = vpop.permute.xlu0 %345
    %v347 = vsel %vm143, %v346, 0
    %349 = vmatprep.subr.mxu0 0.0
    %350 = vmatpush1.msra.mxu0 %v23
    %351 = vmatprep.subr.mxu0 0.0
    %352 = vmatpush1.msra.mxu0 %v24
    %353 = vmatprep.subr.mxu0 0.0
    %354 = vmatpush1.msra.mxu0 %v25
    %355 = vmatprep.subr.mxu0 0.0
    %356 = vmatpush1.msra.mxu0 %v26
    %357 = vmatprep.subr.mxu0 0.0
    %358 = vmatpush1.msra.mxu0 0.0
    %359 = vmatprep.subr.mxu0 0.0
    %360 = vmatpush1.msra.mxu0 0.0
    %361 = vmatprep.subr.mxu0 0.0
    %362 = vmatpush1.msra.mxu0 0.0
    %363 = vmatprep.subr.mxu0 0.0
    %364 = vmatpush1.msra.mxu0 0.0
    %365 = vmatprep.subr.mxu0 0.0
    %366 = vmatpush1.msra.mxu0 0.0
    %367 = vmatprep.subr.mxu0 0.0
    %368 = vmatpush1.msra.mxu0 0.0
    %369 = vmatprep.subr.mxu0 0.0
    %370 = vmatpush1.msra.mxu0 0.0
    %371 = vmatprep.subr.mxu0 0.0
    %372 = vmatpush1.msra.mxu0 0.0
    %373 = vmatprep.subr.mxu0 0.0
    %374 = vmatpush1.msra.mxu0 0.0
    %375 = vmatprep.subr.mxu0 0.0
    %376 = vmatpush1.msra.mxu0 0.0
    %377 = vmatprep.subr.mxu0 0.0
    %378 = vmatpush1.msra.mxu0 0.0
    %379 = vmatprep.subr.mxu0 0.0
    %380 = vmatpush1.msra.mxu0 0.0
    %381 = vmatprep.subr.mxu0 0.0
    %382 = vmatpush1.msra.mxu0 0.0
    %383 = vmatprep.subr.mxu0 0.0
    %384 = vmatpush1.msra.mxu0 0.0
    %385 = vmatprep.subr.mxu0 0.0
    %386 = vmatpush1.msra.mxu0 0.0
    %387 = vmatprep.subr.mxu0 0.0
    %388 = vmatpush1.msra.mxu0 0.0
    %389 = vmatprep.subr.mxu0 0.0
    %390 = vmatpush1.msra.mxu0 0.0
    %391 = vmatprep.subr.mxu0 0.0
    %392 = vmatpush1.msra.mxu0 0.0
    %393 = vmatprep.subr.mxu0 0.0
    %394 = vmatpush1.msra.mxu0 0.0
    %395 = vmatprep.subr.mxu0 0.0
    %396 = vmatpush1.msra.mxu0 0.0
    %397 = vmatprep.subr.mxu0 0.0
    %398 = vmatpush1.msra.mxu0 0.0
    %399 = vmatprep.subr.mxu0 0.0
    %400 = vmatpush1.msra.mxu0 0.0
    %401 = vmatprep.subr.mxu0 0.0
    %402 = vmatpush1.msra.mxu0 0.0
    %403 = vmatprep.subr.mxu0 0.0
    %404 = vmatpush1.msra.mxu0 0.0
    %405 = vmatprep.subr.mxu0 0.0
    %406 = vmatpush1.msra.mxu0 0.0
    %407 = vmatprep.subr.mxu0 0.0
    %408 = vmatpush1.msra.mxu0 0.0
    %409 = vmatprep.subr.mxu0 0.0
    %410 = vmatpush1.msra.mxu0 0.0
    %411 = vmatprep.subr.mxu0 0.0
    %412 = vmatpush1.msra.mxu0 0.0
    %413 = vmatprep.mubr.f32.mxu0 0.0
    %414 = vmatmul.mubr.f32.gmra.mrb[0].mxu0 %v347
    %v415 = vpop.f32.mrb[0].mxu0
    %v416 = vadd.f32 0.0, %v415
    %v417 = vpop.f32.mrb[0].mxu0
    %418 = vdwg.mxu0
    %v419 = vadd.f32 %v137, %v416
    %v420 = vxor.u32 %v419, 2147483648
    %v421 = vmul.f32 %v420, 1.442695
    %v422 = vpow.pop %v421
    %v423 = vadd.f32 %v422, 1.0
    %v424 = vrcp.pop %v423
    %v425 = vmul.f32 1.0, %v424
    %v426 = vmul.f32 %v425, 2.0
    %v427 = vsub.f32 %v426, 1.0
    %v428 = vmul.f32 %v425, %v337
    %430 = vrot.lane.b32.xlu0 %v427, 64
    %v431 = vpop.permute.xlu0 %430
    %v433 = vmul.f32 %v425, %v431
    %435 = vrot.lane.b32.xlu0 %v433, 32
    %v436 = vpop.permute.xlu0 %435
    %v438 = vadd.f32 %v428, %v436
    %v439 = vtanh.pop %v438
    %441 = vrot.lane.b32.xlu0 %v439, 64
    %v442 = vpop.permute.xlu0 %441
    %v444 = vmul.f32 %v425, %v442
    %446 = vrot.lane.b32.xlu0 %v444, 32
    %v447 = vpop.permute.xlu0 %446
    %v448 = vsel %vm143, %v447, 0
    %450 = vmatprep.subr.mxu0 0.0
    %451 = vmatpush1.msra.mxu0 %v23
    %452 = vmatprep.subr.mxu0 0.0
    %453 = vmatpush1.msra.mxu0 %v24
    %454 = vmatprep.subr.mxu0 0.0
    %455 = vmatpush1.msra.mxu0 %v25
    %456 = vmatprep.subr.mxu0 0.0
    %457 = vmatpush1.msra.mxu0 %v26
    %458 = vmatprep.subr.mxu0 0.0
    %459 = vmatpush1.msra.mxu0 0.0
    %460 = vmatprep.subr.mxu0 0.0
    %461 = vmatpush1.msra.mxu0 0.0
    %462 = vmatprep.subr.mxu0 0.0
    %463 = vmatpush1.msra.mxu0 0.0
    %464 = vmatprep.subr.mxu0 0.0
    %465 = vmatpush1.msra.mxu0 0.0
    %466 = vmatprep.subr.mxu0 0.0
    %467 = vmatpush1.msra.mxu0 0.0
    %468 = vmatprep.subr.mxu0 0.0
    %469 = vmatpush1.msra.mxu0 0.0
    %470 = vmatprep.subr.mxu0 0.0
    %471 = vmatpush1.msra.mxu0 0.0
    %472 = vmatprep.subr.mxu0 0.0
    %473 = vmatpush1.msra.mxu0 0.0
    %474 = vmatprep.subr.mxu0 0.0
    %475 = vmatpush1.msra.mxu0 0.0
    %476 = vmatprep.subr.mxu0 0.0
    %477 = vmatpush1.msra.mxu0 0.0
    %478 = vmatprep.subr.mxu0 0.0
    %479 = vmatpush1.msra.mxu0 0.0
    %480 = vmatprep.subr.mxu0 0.0
    %481 = vmatpush1.msra.mxu0 0.0
    %482 = vmatprep.subr.mxu0 0.0
    %483 = vmatpush1.msra.mxu0 0.0
    %484 = vmatprep.subr.mxu0 0.0
    %485 = vmatpush1.msra.mxu0 0.0
    %486 = vmatprep.subr.mxu0 0.0
    %487 = vmatpush1.msra.mxu0 0.0
    %488 = vmatprep.subr.mxu0 0.0
    %489 = vmatpush1.msra.mxu0 0.0
    %490 = vmatprep.subr.mxu0 0.0
    %491 = vmatpush1.msra.mxu0 0.0
    %492 = vmatprep.subr.mxu0 0.0
    %493 = vmatpush1.msra.mxu0 0.0
    %494 = vmatprep.subr.mxu0 0.0
    %495 = vmatpush1.msra.mxu0 0.0
    %496 = vmatprep.subr.mxu0 0.0
    %497 = vmatpush1.msra.mxu0 0.0
    %498 = vmatprep.subr.mxu0 0.0
    %499 = vmatpush1.msra.mxu0 0.0
    %500 = vmatprep.subr.mxu0 0.0
    %501 = vmatpush1.msra.mxu0 0.0
    %502 = vmatprep.subr.mxu0 0.0
    %503 = vmatpush1.msra.mxu0 0.0
    %504 = vmatprep.subr.mxu0 0.0
    %505 = vmatpush1.msra.mxu0 0.0
    %506 = vmatprep.subr.mxu0 0.0
    %507 = vmatpush1.msra.mxu0 0.0
    %508 = vmatprep.subr.mxu0 0.0
    %509 = vmatpush1.msra.mxu0 0.0
    %510 = vmatprep.subr.mxu0 0.0
    %511 = vmatpush1.msra.mxu0 0.0
    %512 = vmatprep.subr.mxu0 0.0
    %513 = vmatpush1.msra.mxu0 0.0
    %514 = vmatprep.mubr.f32.mxu0 0.0
    %515 = vmatmul.mubr.f32.gmra.mrb[0].mxu0 %v448
    %v516 = vpop.f32.mrb[0].mxu0
    %v517 = vadd.f32 0.0, %v516
    %v518 = vpop.f32.mrb[0].mxu0
    %519 = vdwg.mxu0
    %v520 = vadd.f32 %v138, %v517
    %v521 = vxor.u32 %v520, 2147483648
    %v522 = vmul.f32 %v521, 1.442695
    %v523 = vpow.pop %v522
    %v524 = vadd.f32 %v523, 1.0
    %v525 = vrcp.pop %v524
    %v526 = vmul.f32 1.0, %v525
    %v527 = vmul.f32 %v526, 2.0
    %v528 = vsub.f32 %v527, 1.0
    %v529 = vmul.f32 %v526, %v438
    %531 = vrot.lane.b32.xlu0 %v528, 64
    %v532 = vpop.permute.xlu0 %531
    %v534 = vmul.f32 %v526, %v532
    %536 = vrot.lane.b32.xlu0 %v534, 32
    %v537 = vpop.permute.xlu0 %536
    %v539 = vadd.f32 %v529, %v537
    %v540 = vtanh.pop %v539
    %542 = vrot.lane.b32.xlu0 %v540, 64
    %v543 = vpop.permute.xlu0 %542
    %v545 = vmul.f32 %v526, %v543
    %547 = vrot.lane.b32.xlu0 %v545, 32
    %v548 = vpop.permute.xlu0 %547
    %v549 = vsel %vm143, %v548, 0
    %551 = vmatprep.subr.mxu0 0.0
    %552 = vmatpush1.msra.mxu0 %v23
    %553 = vmatprep.subr.mxu0 0.0
    %554 = vmatpush1.msra.mxu0 %v24
    %555 = vmatprep.subr.mxu0 0.0
    %556 = vmatpush1.msra.mxu0 %v25
    %557 = vmatprep.subr.mxu0 0.0
    %558 = vmatpush1.msra.mxu0 %v26
    %559 = vmatprep.subr.mxu0 0.0
    %560 = vmatpush1.msra.mxu0 0.0
    %561 = vmatprep.subr.mxu0 0.0
    %562 = vmatpush1.msra.mxu0 0.0
    %563 = vmatprep.subr.mxu0 0.0
    %564 = vmatpush1.msra.mxu0 0.0
    %565 = vmatprep.subr.mxu0 0.0
    %566 = vmatpush1.msra.mxu0 0.0
    %567 = vmatprep.subr.mxu0 0.0
    %568 = vmatpush1.msra.mxu0 0.0
    %569 = vmatprep.subr.mxu0 0.0
    %570 = vmatpush1.msra.mxu0 0.0
    %571 = vmatprep.subr.mxu0 0.0
    %572 = vmatpush1.msra.mxu0 0.0
    %573 = vmatprep.subr.mxu0 0.0
    %574 = vmatpush1.msra.mxu0 0.0
    %575 = vmatprep.subr.mxu0 0.0
    %576 = vmatpush1.msra.mxu0 0.0
    %577 = vmatprep.subr.mxu0 0.0
    %578 = vmatpush1.msra.mxu0 0.0
    %579 = vmatprep.subr.mxu0 0.0
    %580 = vmatpush1.msra.mxu0 0.0
    %581 = vmatprep.subr.mxu0 0.0
    %582 = vmatpush1.msra.mxu0 0.0
    %583 = vmatprep.subr.mxu0 0.0
    %584 = vmatpush1.msra.mxu0 0.0
    %585 = vmatprep.subr.mxu0 0.0
    %586 = vmatpush1.msra.mxu0 0.0
    %587 = vmatprep.subr.mxu0 0.0
    %588 = vmatpush1.msra.mxu0 0.0
    %589 = vmatprep.subr.mxu0 0.0
    %590 = vmatpush1.msra.mxu0 0.0
    %591 = vmatprep.subr.mxu0 0.0
    %592 = vmatpush1.msra.mxu0 0.0
    %593 = vmatprep.subr.mxu0 0.0
    %594 = vmatpush1.msra.mxu0 0.0
    %595 = vmatprep.subr.mxu0 0.0
    %596 = vmatpush1.msra.mxu0 0.0
    %597 = vmatprep.subr.mxu0 0.0
    %598 = vmatpush1.msra.mxu0 0.0
    %599 = vmatprep.subr.mxu0 0.0
    %600 = vmatpush1.msra.mxu0 0.0
    %601 = vmatprep.subr.mxu0 0.0
    %602 = vmatpush1.msra.mxu0 0.0
    %603 = vmatprep.subr.mxu0 0.0
    %604 = vmatpush1.msra.mxu0 0.0
    %605 = vmatprep.subr.mxu0 0.0
    %606 = vmatpush1.msra.mxu0 0.0
    %607 = vmatprep.subr.mxu0 0.0
    %608 = vmatpush1.msra.mxu0 0.0
    %609 = vmatprep.subr.mxu0 0.0
    %610 = vmatpush1.msra.mxu0 0.0
    %611 = vmatprep.subr.mxu0 0.0
    %612 = vmatpush1.msra.mxu0 0.0
    %613 = vmatprep.subr.mxu0 0.0
    %614 = vmatpush1.msra.mxu0 0.0
    %615 = vmatprep.mubr.f32.mxu0 0.0
    %616 = vmatmul.mubr.f32.gmra.mrb[0].mxu0 %v549
    %v617 = vpop.f32.mrb[0].mxu0
    %v618 = vadd.f32 0.0, %v617
    %v619 = vpop.f32.mrb[0].mxu0
    %620 = vdwg.mxu0
    %v621 = vadd.f32 %v139, %v618
    %v622 = vxor.u32 %v621, 2147483648
    %v623 = vmul.f32 %v622, 1.442695
    %v624 = vpow.pop %v623
    %v625 = vadd.f32 %v624, 1.0
    %v626 = vrcp.pop %v625
    %v627 = vmul.f32 1.0, %v626
    %v628 = vmul.f32 %v627, 2.0
    %v629 = vsub.f32 %v628, 1.0
    %v630 = vmul.f32 %v627, %v539
    %632 = vrot.lane.b32.xlu0 %v629, 64
    %v633 = vpop.permute.xlu0 %632
    %v635 = vmul.f32 %v627, %v633
    %637 = vrot.lane.b32.xlu0 %v635, 32
    %v638 = vpop.permute.xlu0 %637
    %v640 = vadd.f32 %v630, %v638
    %v641 = vtanh.pop %v640
    %643 = vrot.lane.b32.xlu0 %v641, 64
    %v644 = vpop.permute.xlu0 %643
    %v646 = vmul.f32 %v627, %v644
    %648 = vrot.lane.b32.xlu0 %v646, 32
    %v649 = vpop.permute.xlu0 %648
    %v650 = vsel %vm143, %v649, 0
    %652 = vmatprep.subr.mxu0 0.0
    %653 = vmatpush1.msra.mxu0 %v23
    %654 = vmatprep.subr.mxu0 0.0
    %655 = vmatpush1.msra.mxu0 %v24
    %656 = vmatprep.subr.mxu0 0.0
    %657 = vmatpush1.msra.mxu0 %v25
    %658 = vmatprep.subr.mxu0 0.0
    %659 = vmatpush1.msra.mxu0 %v26
    %660 = vmatprep.subr.mxu0 0.0
    %661 = vmatpush1.msra.mxu0 0.0
    %662 = vmatprep.subr.mxu0 0.0
    %663 = vmatpush1.msra.mxu0 0.0
    %664 = vmatprep.subr.mxu0 0.0
    %665 = vmatpush1.msra.mxu0 0.0
    %666 = vmatprep.subr.mxu0 0.0
    %667 = vmatpush1.msra.mxu0 0.0
    %668 = vmatprep.subr.mxu0 0.0
    %669 = vmatpush1.msra.mxu0 0.0
    %670 = vmatprep.subr.mxu0 0.0
    %671 = vmatpush1.msra.mxu0 0.0
    %672 = vmatprep.subr.mxu0 0.0
    %673 = vmatpush1.msra.mxu0 0.0
    %674 = vmatprep.subr.mxu0 0.0
    %675 = vmatpush1.msra.mxu0 0.0
    %676 = vmatprep.subr.mxu0 0.0
    %677 = vmatpush1.msra.mxu0 0.0
    %678 = vmatprep.subr.mxu0 0.0
    %679 = vmatpush1.msra.mxu0 0.0
    %680 = vmatprep.subr.mxu0 0.0
    %681 = vmatpush1.msra.mxu0 0.0
    %682 = vmatprep.subr.mxu0 0.0
    %683 = vmatpush1.msra.mxu0 0.0
    %684 = vmatprep.subr.mxu0 0.0
    %685 = vmatpush1.msra.mxu0 0.0
    %686 = vmatprep.subr.mxu0 0.0
    %687 = vmatpush1.msra.mxu0 0.0
    %688 = vmatprep.subr.mxu0 0.0
    %689 = vmatpush1.msra.mxu0 0.0
    %690 = vmatprep.subr.mxu0 0.0
    %691 = vmatpush1.msra.mxu0 0.0
    %692 = vmatprep.subr.mxu0 0.0
    %693 = vmatpush1.msra.mxu0 0.0
    %694 = vmatprep.subr.mxu0 0.0
    %695 = vmatpush1.msra.mxu0 0.0
    %696 = vmatprep.subr.mxu0 0.0
    %697 = vmatpush1.msra.mxu0 0.0
    %698 = vmatprep.subr.mxu0 0.0
    %699 = vmatpush1.msra.mxu0 0.0
    %700 = vmatprep.subr.mxu0 0.0
    %701 = vmatpush1.msra.mxu0 0.0
    %702 = vmatprep.subr.mxu0 0.0
    %703 = vmatpush1.msra.mxu0 0.0
    %704 = vmatprep.subr.mxu0 0.0
    %705 = vmatpush1.msra.mxu0 0.0
    %706 = vmatprep.subr.mxu0 0.0
    %707 = vmatpush1.msra.mxu0 0.0
    %708 = vmatprep.subr.mxu0 0.0
    %709 = vmatpush1.msra.mxu0 0.0
    %710 = vmatprep.subr.mxu0 0.0
    %711 = vmatpush1.msra.mxu0 0.0
    %712 = vmatprep.subr.mxu0 0.0
    %713 = vmatpush1.msra.mxu0 0.0
    %714 = vmatprep.subr.mxu0 0.0
    %715 = vmatpush1.msra.mxu0 0.0
    %716 = vmatprep.mubr.f32.mxu0 0.0
    %717 = vmatmul.mubr.f32.gmra.mrb[0].mxu0 %v650
    %v718 = vpop.f32.mrb[0].mxu0
    %v719 = vadd.f32 0.0, %v718
    %v720 = vpop.f32.mrb[0].mxu0
    %721 = vdwg.mxu0
    %v722 = vadd.f32 %v140, %v719
    %v723 = vxor.u32 %v722, 2147483648
    %v724 = vmul.f32 %v723, 1.442695
    %v725 = vpow.pop %v724
    %v726 = vadd.f32 %v725, 1.0
    %v727 = vrcp.pop %v726
    %v728 = vmul.f32 1.0, %v727
    %v729 = vmul.f32 %v728, 2.0
    %v730 = vsub.f32 %v729, 1.0
    %v731 = vmul.f32 %v728, %v640
    %733 = vrot.lane.b32.xlu0 %v730, 64
    %v734 = vpop.permute.xlu0 %733
    %v736 = vmul.f32 %v728, %v734
    %738 = vrot.lane.b32.xlu0 %v736, 32
    %v739 = vpop.permute.xlu0 %738
    %v741 = vadd.f32 %v731, %v739
    %v742 = vtanh.pop %v741
    %744 = vrot.lane.b32.xlu0 %v742, 64
    %v745 = vpop.permute.xlu0 %744
    %v747 = vmul.f32 %v728, %v745
    %749 = vrot.lane.b32.xlu0 %v747, 32
    %v750 = vpop.permute.xlu0 %749
    %v751 = vsel %vm143, %v750, 0
    %753 = vmatprep.subr.mxu0 0.0
    %754 = vmatpush1.msra.mxu0 %v23
    %755 = vmatprep.subr.mxu0 0.0
    %756 = vmatpush1.msra.mxu0 %v24
    %757 = vmatprep.subr.mxu0 0.0
    %758 = vmatpush1.msra.mxu0 %v25
    %759 = vmatprep.subr.mxu0 0.0
    %760 = vmatpush1.msra.mxu0 %v26
    %761 = vmatprep.subr.mxu0 0.0
    %762 = vmatpush1.msra.mxu0 0.0
    %763 = vmatprep.subr.mxu0 0.0
    %764 = vmatpush1.msra.mxu0 0.0
    %765 = vmatprep.subr.mxu0 0.0
    %766 = vmatpush1.msra.mxu0 0.0
    %767 = vmatprep.subr.mxu0 0.0
    %768 = vmatpush1.msra.mxu0 0.0
    %769 = vmatprep.subr.mxu0 0.0
    %770 = vmatpush1.msra.mxu0 0.0
    %771 = vmatprep.subr.mxu0 0.0
    %772 = vmatpush1.msra.mxu0 0.0
    %773 = vmatprep.subr.mxu0 0.0
    %774 = vmatpush1.msra.mxu0 0.0
    %775 = vmatprep.subr.mxu0 0.0
    %776 = vmatpush1.msra.mxu0 0.0
    %777 = vmatprep.subr.mxu0 0.0
    %778 = vmatpush1.msra.mxu0 0.0
    %779 = vmatprep.subr.mxu0 0.0
    %780 = vmatpush1.msra.mxu0 0.0
    %781 = vmatprep.subr.mxu0 0.0
    %782 = vmatpush1.msra.mxu0 0.0
    %783 = vmatprep.subr.mxu0 0.0
    %784 = vmatpush1.msra.mxu0 0.0
    %785 = vmatprep.subr.mxu0 0.0
    %786 = vmatpush1.msra.mxu0 0.0
    %787 = vmatprep.subr.mxu0 0.0
    %788 = vmatpush1.msra.mxu0 0.0
    %789 = vmatprep.subr.mxu0 0.0
    %790 = vmatpush1.msra.mxu0 0.0
    %791 = vmatprep.subr.mxu0 0.0
    %792 = vmatpush1.msra.mxu0 0.0
    %793 = vmatprep.subr.mxu0 0.0
    %794 = vmatpush1.msra.mxu0 0.0
    %795 = vmatprep.subr.mxu0 0.0
    %796 = vmatpush1.msra.mxu0 0.0
    %797 = vmatprep.subr.mxu0 0.0
    %798 = vmatpush1.msra.mxu0 0.0
    %799 = vmatprep.subr.mxu0 0.0
    %800 = vmatpush1.msra.mxu0 0.0
    %801 = vmatprep.subr.mxu0 0.0
    %802 = vmatpush1.msra.mxu0 0.0
    %803 = vmatprep.subr.mxu0 0.0
    %804 = vmatpush1.msra.mxu0 0.0
    %805 = vmatprep.subr.mxu0 0.0
    %806 = vmatpush1.msra.mxu0 0.0
    %807 = vmatprep.subr.mxu0 0.0
    %808 = vmatpush1.msra.mxu0 0.0
    %809 = vmatprep.subr.mxu0 0.0
    %810 = vmatpush1.msra.mxu0 0.0
    %811 = vmatprep.subr.mxu0 0.0
    %812 = vmatpush1.msra.mxu0 0.0
    %813 = vmatprep.subr.mxu0 0.0
    %814 = vmatpush1.msra.mxu0 0.0
    %815 = vmatprep.subr.mxu0 0.0
    %816 = vmatpush1.msra.mxu0 0.0
    %817 = vmatprep.mubr.f32.mxu0 0.0
    %818 = vmatmul.mubr.f32.gmra.mrb[0].mxu0 %v751
    %v819 = vpop.f32.mrb[0].mxu0
    %v820 = vadd.f32 0.0, %v819
    %v821 = vpop.f32.mrb[0].mxu0
    %822 = vdwg.mxu0
    %v823 = vadd.f32 %v141, %v820
    %v824 = vxor.u32 %v823, 2147483648
    %v825 = vmul.f32 %v824, 1.442695
    %v826 = vpow.pop %v825
    %v827 = vadd.f32 %v826, 1.0
    %v828 = vrcp.pop %v827
    %v829 = vmul.f32 1.0, %v828
    %v830 = vmul.f32 %v829, 2.0
    %v831 = vsub.f32 %v830, 1.0
    %v832 = vmul.f32 %v829, %v741
    %834 = vrot.lane.b32.xlu0 %v831, 64
    %v835 = vpop.permute.xlu0 %834
    %v837 = vmul.f32 %v829, %v835
    %839 = vrot.lane.b32.xlu0 %v837, 32
    %v840 = vpop.permute.xlu0 %839
    %v842 = vadd.f32 %v832, %v840
    %v843 = vtanh.pop %v842
    %845 = vrot.lane.b32.xlu0 %v843, 64
    %v846 = vpop.permute.xlu0 %845
    %v848 = vmul.f32 %v829, %v846
    %850 = vrot.lane.b32.xlu0 %v848, 32
    %v851 = vpop.permute.xlu0 %850
    %v852 = vsel %vm143, %v851, 0
    %854 = vmatprep.subr.mxu0 0.0
    %855 = vmatpush1.msra.mxu0 %v23
    %856 = vmatprep.subr.mxu0 0.0
    %857 = vmatpush1.msra.mxu0 %v24
    %858 = vmatprep.subr.mxu0 0.0
    %859 = vmatpush1.msra.mxu0 %v25
    %860 = vmatprep.subr.mxu0 0.0
    %861 = vmatpush1.msra.mxu0 %v26
    %862 = vmatprep.subr.mxu0 0.0
    %863 = vmatpush1.msra.mxu0 0.0
    %864 = vmatprep.subr.mxu0 0.0
    %865 = vmatpush1.msra.mxu0 0.0
    %866 = vmatprep.subr.mxu0 0.0
    %867 = vmatpush1.msra.mxu0 0.0
    %868 = vmatprep.subr.mxu0 0.0
    %869 = vmatpush1.msra.mxu0 0.0
    %870 = vmatprep.subr.mxu0 0.0
    %871 = vmatpush1.msra.mxu0 0.0
    %872 = vmatprep.subr.mxu0 0.0
    %873 = vmatpush1.msra.mxu0 0.0
    %874 = vmatprep.subr.mxu0 0.0
    %875 = vmatpush1.msra.mxu0 0.0
    %876 = vmatprep.subr.mxu0 0.0
    %877 = vmatpush1.msra.mxu0 0.0
    %878 = vmatprep.subr.mxu0 0.0
    %879 = vmatpush1.msra.mxu0 0.0
    %880 = vmatprep.subr.mxu0 0.0
    %881 = vmatpush1.msra.mxu0 0.0
    %882 = vmatprep.subr.mxu0 0.0
    %883 = vmatpush1.msra.mxu0 0.0
    %884 = vmatprep.subr.mxu0 0.0
    %885 = vmatpush1.msra.mxu0 0.0
    %886 = vmatprep.subr.mxu0 0.0
    %887 = vmatpush1.msra.mxu0 0.0
    %888 = vmatprep.subr.mxu0 0.0
    %889 = vmatpush1.msra.mxu0 0.0
    %890 = vmatprep.subr.mxu0 0.0
    %891 = vmatpush1.msra.mxu0 0.0
    %892 = vmatprep.subr.mxu0 0.0
    %893 = vmatpush1.msra.mxu0 0.0
    %894 = vmatprep.subr.mxu0 0.0
    %895 = vmatpush1.msra.mxu0 0.0
    %896 = vmatprep.subr.mxu0 0.0
    %897 = vmatpush1.msra.mxu0 0.0
    %898 = vmatprep.subr.mxu0 0.0
    %899 = vmatpush1.msra.mxu0 0.0
    %900 = vmatprep.subr.mxu0 0.0
    %901 = vmatpush1.msra.mxu0 0.0
    %902 = vmatprep.subr.mxu0 0.0
    %903 = vmatpush1.msra.mxu0 0.0
    %904 = vmatprep.subr.mxu0 0.0
    %905 = vmatpush1.msra.mxu0 0.0
    %906 = vmatprep.subr.mxu0 0.0
    %907 = vmatpush1.msra.mxu0 0.0
    %908 = vmatprep.subr.mxu0 0.0
    %909 = vmatpush1.msra.mxu0 0.0
    %910 = vmatprep.subr.mxu0 0.0
    %911 = vmatpush1.msra.mxu0 0.0
    %912 = vmatprep.subr.mxu0 0.0
    %913 = vmatpush1.msra.mxu0 0.0
    %914 = vmatprep.subr.mxu0 0.0
    %915 = vmatpush1.msra.mxu0 0.0
    %916 = vmatprep.subr.mxu0 0.0
    %917 = vmatpush1.msra.mxu0 0.0
    %918 = vmatprep.mubr.f32.mxu0 0.0
    %919 = vmatmul.mubr.f32.gmra.mrb[0].mxu0 %v852
    %v920 = vpop.f32.mrb[0].mxu0
    %v921 = vadd.f32 0.0, %v920
    %v922 = vpop.f32.mrb[0].mxu0
    %923 = vdwg.mxu0
    %v924 = vadd.f32 %v142, %v921
    %v925 = vxor.u32 %v924, 2147483648
    %v926 = vmul.f32 %v925, 1.442695
    %v927 = vpow.pop %v926
    %v928 = vadd.f32 %v927, 1.0
    %v929 = vrcp.pop %v928
    %v930 = vmul.f32 1.0, %v929
    %v931 = vmul.f32 %v930, 2.0
    %v932 = vsub.f32 %v931, 1.0
    %v933 = vmul.f32 %v930, %v842
    %935 = vrot.lane.b32.xlu0 %v932, 64
    %v936 = vpop.permute.xlu0 %935
    %v938 = vmul.f32 %v930, %v936
    %940 = vrot.lane.b32.xlu0 %v938, 32
    %v941 = vpop.permute.xlu0 %940
    %v943 = vadd.f32 %v933, %v941
    %v944 = vtanh.pop %v943
    %946 = vrot.lane.b32.xlu0 %v944, 64
    %v947 = vpop.permute.xlu0 %946
    %v949 = vmul.f32 %v930, %v947
    %951 = vrot.lane.b32.xlu0 %v949, 32
    %v952 = vpop.permute.xlu0 %951
    %vm954 = vcmask 257024
    %955 = vst.msk [vmem:[#allocation2] sm:$0xf] %vm954, %v952
    // Predicated region
    $region10: #{tpu_custom_call.1} parent=1 // pred_check
      _
    $region11: #{tpu_custom_call.1} parent=1 // pred_check_branch
      %957 = sbr.rel (0) target = $region13
    $region12: #{tpu_custom_call.1} parent=1 // pred_region
      %s959 = ssub.s32 64, 64
      %960 = vsyncadd [#allocation3], %s959
      %s962 = sshll.u32 [#allocation2], 4
      %s963 = int_to_ptr.vmem [resolvable:$true] %s962
      %965 = dma.vmem_to_hbm [thread:$0]  %s963, 64, %s2, [#allocation3]
    $region13: #{tpu_custom_call.1} parent=1 // pred_fallthru
      _
    // Predicated region
    $region14: #{tpu_custom_call.1} parent=1 // pred_check
      _
    $region15: #{tpu_custom_call.1} parent=1 // pred_check_branch
      %967 = sbr.rel (0) target = $region17
    $region16: #{tpu_custom_call.1} parent=1 // pred_region
      %968 = dma.done [#allocation3], 64
    $region17: #{tpu_custom_call.1} parent=1 // pred_fallthru
      _
    %969 = vsyncpa [#allocation3], 1

</llo_original>
